<compile_context>
chip_gen: v5e
topology: v5e:2x2
jax: 0.10.0
libtpu: 0.0.40
codegen_flags: <defaults>
</compile_context>

<pallas_src>
import jax
import jax.numpy as jnp
from jax import lax
from jax.experimental import pallas as pl
from jax.experimental.pallas import tpu as pltpu

EPS = 1e-6


# --------------------------------------------------------------------------
# One-shot projection kernel: scale/shift = SiLU(emb) @ W + b, chunked.
# Runs once per call (no grid) on the tiny (B, D) conditioning vector.
# --------------------------------------------------------------------------
def _proj_kernel(emb_ref, w_ref, b_ref, scale_ref, shift_ref):
    d = scale_ref.shape[-1]
    e = emb_ref[...].astype(jnp.float32)                     # (B, D)
    e = e * jax.nn.sigmoid(e)                                # SiLU
    y = (jnp.dot(e, w_ref[...].astype(jnp.float32),
                 preferred_element_type=jnp.float32)
         + b_ref[...].astype(jnp.float32))                   # (B, 2D)
    # torch.chunk(emb, 2, dim=1): first half = scale, second half = shift.
    scale_ref[...] = y[:, :d]
    shift_ref[...] = y[:, d:]


def _compute_scale_shift(emb, w, b):
    B, D = emb.shape
    return pl.pallas_call(
        _proj_kernel,
        out_shape=(jax.ShapeDtypeStruct((B, D), jnp.float32),
                   jax.ShapeDtypeStruct((B, D), jnp.float32)),
    )(emb, w, b)


# --------------------------------------------------------------------------
# Tiled LayerNorm + adaptive affine kernel (memory-bound part).
# --------------------------------------------------------------------------
def _ada_ln_zero_final_kernel(x_ref, scale_ref, shift_ref, o_ref):
    # x_ref:     (1, TT, D)  current time tile of x for batch b
    # scale_ref: (1, 1, D)   precomputed scale[b]
    # shift_ref: (1, 1, D)   precomputed shift[b]
    x = x_ref[0].astype(jnp.float32)                          # (TT, D)
    one_plus_scale = 1.0 + scale_ref[0]                       # (1, D) f32
    shift = shift_ref[0]                                      # (1, D) f32

    # LayerNorm over D, elementwise_affine=False, eps=1e-6 (two-pass variance,
    # same math as torch.nn.LayerNorm).
    mean = jnp.mean(x, axis=-1, keepdims=True)                # (TT, 1)
    centered = x - mean
    var = jnp.mean(centered * centered, axis=-1, keepdims=True)
    inv_std = lax.rsqrt(var + EPS)                            # (TT, 1)

    # norm(x) * (1 + scale) + shift, folded without a separate 'normed' temp.
    o_ref[0] = (centered * (inv_std * one_plus_scale) + shift).astype(o_ref.dtype)


def _pick_time_tile(T, D, itemsize, B, target_block_bytes):
    """Pick the time-tile length: per-dtype sublane multiple, ~target bytes."""
    sub = {4: 8, 2: 16, 1: 32}.get(itemsize, 8)
    tt = max(sub, ((target_block_bytes // max(1, D * itemsize)) // sub) * sub)
    if tt >= T:
        tt = T                      # full dim: always a legal block shape
        if B == 1 and T >= 2 * sub:
            # v7x has 2 TensorCores: keep >= 2 parallel grid iterations even
            # for single-batch calls (costs nothing on v5e/v6e).
            tt = ((-(-T // 2)) + sub - 1) // sub * sub
    return tt


def ada_layer_norm_zero_final(x, emb, params, *, target_block_bytes=2 << 20):
    """x: (B, T, D), emb: (B, D). params from init_params. Returns (B, T, D)."""
    B, T, D = x.shape
    itemsize = jnp.dtype(x.dtype).itemsize

    # ---- hoisted conditioning path: scale/shift as (B, D) f32 ----
    scale, shift = _compute_scale_shift(emb, params["w"], params["b"])
    scale3 = scale.reshape(B, 1, D)
    shift3 = shift.reshape(B, 1, D)

    # ---- tiled LN + affine over (B, T) ----
    tt = _pick_time_tile(T, D, itemsize, B, target_block_bytes)
    grid = (B, pl.cdiv(T, tt))

    x_block_bytes = tt * D * itemsize
    # 2 x-in buffers + 2 out buffers + double-buffered scale/shift vectors.
    vmem_need = 4 * x_block_bytes + 4 * D * 4
    vmem_limit = min(48 << 20, max(4 << 20, int(vmem_need * 1.5) + (1 << 20)))

    cost = pl.CostEstimate(
        flops=7 * B * T * D,
        transcendentals=B * T,                       # rsqrt per row
        bytes_accessed=2 * B * T * D * itemsize + 2 * B * D * 4,
    )

    return pl.pallas_call(
        _ada_ln_zero_final_kernel,
        out_shape=jax.ShapeDtypeStruct((B, T, D), x.dtype),
        grid_spec=pltpu.PrefetchScalarGridSpec(
            num_scalar_prefetch=0,
            grid=grid,
            in_specs=[
                pl.BlockSpec((1, tt, D), lambda b, t: (b, t, 0)),   # x tile
                pl.BlockSpec((1, 1, D), lambda b, t: (b, 0, 0)),    # scale[b]
                pl.BlockSpec((1, 1, D), lambda b, t: (b, 0, 0)),    # shift[b]
            ],
            out_specs=pl.BlockSpec((1, tt, D), lambda b, t: (b, t, 0)),
        ),
        compiler_params=pltpu.CompilerParams(
            dimension_semantics=("parallel", "parallel"),
            vmem_limit_bytes=vmem_limit),
        cost_estimate=cost,
    )(x, scale3, shift3)


def init_params(key, dim):
    """Synthetic init matching nn.Linear(dim, 2*dim) of the PyTorch module.

    Stored in JAX (in, out) layout as one concatenated (dim, 2*dim) weight and
    (1, 2*dim) bias.  Column order follows torch.chunk(emb, 2, dim=1):
    first half = scale, second half = shift.  NOTE: real PyTorch checkpoints
    store Linear weights as (out, in) and need a transpose before use.
    """
    k1, k2 = jax.random.split(key, 2)
    w = jax.random.normal(k1, (dim, 2 * dim), jnp.float32) * (1.0 / dim) ** 0.5
    b = jax.random.normal(k2, (1, 2 * dim), jnp.float32) * 0.02
    return {"w": w, "b": b}


def ada_reference(x, emb, params):
    """Pure-JAX reference with the same math as the PyTorch module."""
    D = x.shape[-1]
    e = emb * jax.nn.sigmoid(emb)                                   # SiLU
    y = e @ params["w"] + params["b"]                               # (B, 2D)
    scale, shift = y[:, :D], y[:, D:]
    mean = x.mean(-1, keepdims=True)
    var = ((x - mean) ** 2).mean(-1, keepdims=True)
    normed = (x - mean) / jnp.sqrt(var + EPS)
    return normed * (1.0 + scale)[:, None, :] + shift[:, None, :]


if __name__ == "__main__":
    B, T, DIM = 2, 32, 128
    key = jax.random.PRNGKey(0)
    kx, ke, kp = jax.random.split(key, 3)
    x = jax.random.normal(kx, (B, T, DIM), jnp.float32)
    emb = jax.random.normal(ke, (B, DIM), jnp.float32)
    params = init_params(kp, DIM)

    ref = ada_reference(x, emb, params)

    # Default (full-T tile) path.
    out = jax.block_until_ready(ada_layer_norm_zero_final(x, emb, params))
    assert out.shape == (B, T, DIM), out.shape
    assert jnp.allclose(out, ref, atol=1e-4, rtol=1e-4), \
        float(jnp.max(jnp.abs(out - ref)))

    # Small target block size to exercise the multi-time-tile grid path.
    out_tiled = jax.block_until_ready(
        ada_layer_norm_zero_final(x, emb, params, target_block_bytes=4096))
    assert jnp.allclose(out_tiled, ref, atol=1e-4, rtol=1e-4), \
        float(jnp.max(jnp.abs(out_tiled - ref)))

    print("KERNEL_OK")
</pallas_src>

<mosaic_0001>
module attributes {stable_mosaic.version = 11 : i64} {
  func.func @_proj_kernel(%arg0: memref<2x128xf32, #tpu.memory_space<vmem>>, %arg1: memref<128x256xf32, #tpu.memory_space<vmem>>, %arg2: memref<1x256xf32, #tpu.memory_space<vmem>>, %arg3: memref<2x128xf32, #tpu.memory_space<vmem>>, %arg4: memref<2x128xf32, #tpu.memory_space<vmem>>) attributes {dimension_semantics = [], scalar_prefetch = 0 : i64, scratch_operands = 0 : i64, tpu.core_type = #tpu.core_type<tc>} {
    %c0 = arith.constant 0 : index
    %c0_0 = arith.constant 0 : index
    %0 = vector.load %arg0[%c0, %c0_0] : memref<2x128xf32, #tpu.memory_space<vmem>>, vector<2x128xf32>
    %1 = arith.negf %0 : vector<2x128xf32>
    %2 = math.exp %1 : vector<2x128xf32>
    %cst = arith.constant 1.000000e+00 : f32
    %3 = vector.broadcast %cst : f32 to vector<2x128xf32>
    %4 = arith.addf %3, %2 : vector<2x128xf32>
    %5 = arith.divf %3, %4 : vector<2x128xf32>
    %6 = arith.mulf %0, %5 : vector<2x128xf32>
    %c0_1 = arith.constant 0 : index
    %c0_2 = arith.constant 0 : index
    %7 = vector.load %arg1[%c0_1, %c0_2] : memref<128x256xf32, #tpu.memory_space<vmem>>, vector<128x256xf32>
    %cst_3 = arith.constant dense<0.000000e+00> : vector<2x256xf32>
    %8 = tpu.matmul %6, %7, %cst_3 {dimension_numbers = #tpu.dot_dimension_numbers<[1], [0], [0], [1], [0, 0, 1, 1], [], []>} : vector<2x128xf32>, vector<128x256xf32>, vector<2x256xf32> -> vector<2x256xf32>
    %c0_4 = arith.constant 0 : index
    %c0_5 = arith.constant 0 : index
    %9 = vector.load %arg2[%c0_4, %c0_5] : memref<1x256xf32, #tpu.memory_space<vmem>>, vector<1x256xf32>
    %10 = vector.broadcast %9 : vector<1x256xf32> to vector<2x256xf32>
    %11 = arith.addf %8, %10 : vector<2x256xf32>
    %12 = vector.extract_strided_slice %11 {offsets = [0, 0], sizes = [2, 128], strides = [1, 1]} : vector<2x256xf32> to vector<2x128xf32>
    %c0_6 = arith.constant 0 : index
    %c0_7 = arith.constant 0 : index
    %13 = vector.load %arg3[%c0_6, %c0_7] : memref<2x128xf32, #tpu.memory_space<vmem>>, vector<2x128xf32>
    tpu.vector_store %arg3[%c0_6, %c0_7], %12 {strides = array<i32>} : memref<2x128xf32, #tpu.memory_space<vmem>>, vector<2x128xf32>,
    %14 = vector.extract_strided_slice %11 {offsets = [0, 128], sizes = [2, 128], strides = [1, 1]} : vector<2x256xf32> to vector<2x128xf32>
    %c0_8 = arith.constant 0 : index
    %c0_9 = arith.constant 0 : index
    %15 = vector.load %arg4[%c0_8, %c0_9] : memref<2x128xf32, #tpu.memory_space<vmem>>, vector<2x128xf32>
    tpu.vector_store %arg4[%c0_8, %c0_9], %14 {strides = array<i32>} : memref<2x128xf32, #tpu.memory_space<vmem>>, vector<2x128xf32>,
    return
  }
}

</mosaic_0001>

<llo_original>
// kernel: tpu_custom_call.1
$region0: #{tpu_custom_call.1}
  #allocation0 [shape = 'u32[]', space=smem, size = 0x4, offset = 0x4, fixed_abs, tag = 'smem constant byte address 0x4 - core index']
  #allocation1 [shape = 'u32[72,128]{1,0:T(1,128)}', space=vmem, size = 0x9000, scoped, tag = 'internal scratch']
  %s0 = inlined_call_operand.hbm [shape: f32[2,128], index: 0, kind: input, shape index: {}]
  %s1 = inlined_call_operand.hbm [shape: f32[128,256], index: 1, kind: input, shape index: {}]
  %s2 = inlined_call_operand.hbm [shape: f32[1,256], index: 2, kind: input, shape index: {}]
  %s3 = inlined_call_operand.hbm [shape: f32[2,128], index: 3, kind: output, shape index: {0}]
  %s4 = inlined_call_operand.hbm [shape: f32[2,128], index: 4, kind: output, shape index: {1}]
  %5 = xla_tuple %s3, %s4
  %s6 = sld [smem:[#allocation0]]
  $region42: #{tpu_custom_call.1} parent=0
    _
  %s8 = ssub.s32 1, %s6
  %s9 = scalar_select 0, %s8, %s6
  $region1: #{tpu_custom_call.1} parent=0
    #allocation2 [shape = 'u8[1024]{0}', space=vmem, size = 0x400, scoped, tag = 'input window, operand 0, single buffered']
    #allocation3 [shape = 's32[1]{0}', space=sflag, size = 0x4, scoped, tag = 'scoped memory for tpu_custom_call.1']
    #allocation4 [shape = 's32[1]{0}', space=sflag, size = 0x4, scoped, tag = 'scoped memory for tpu_custom_call.1']
    #allocation5 [shape = 'u8[131072]{0}', space=vmem, size = 0x20000, scoped, tag = 'input window, operand 1, single buffered']
    #allocation6 [shape = 's32[1]{0}', space=sflag, size = 0x4, scoped, tag = 'scoped memory for tpu_custom_call.1']
    #allocation7 [shape = 'u8[1024]{0}', space=vmem, size = 0x400, scoped, tag = 'input window, operand 2, single buffered']
    #allocation8 [shape = 'u8[1024]{0}', space=vmem, size = 0x400, scoped, tag = 'output window, operand 0, single buffered']
    #allocation9 [shape = 'u8[1024]{0}', space=vmem, size = 0x400, scoped, tag = 'output window, operand 1, single buffered']
    #allocation10 [shape = 's32[1]{0}', space=sflag, size = 0x4, scoped, tag = 'scoped memory for tpu_custom_call.1']
    %10 = vsyncpa [#allocation3], 0
    %11 = vsyncpa [#allocation6], 0
    %12 = vsyncpa [#allocation4], 0
    %13 = vsyncpa [#allocation10], 0
    // Predicated region
    $region2: #{tpu_custom_call.1} parent=1 // pred_check
      _
    $region3: #{tpu_custom_call.1} parent=1 // pred_check_branch
      %15 = sbr.rel (0) target = $region5
    $region4: #{tpu_custom_call.1} parent=1 // pred_region
      %17 = vsyncadd [#allocation3], 0
      %s19 = sshll.u32 %s0, 4
      %s20 = int_to_ptr.hbm [resolvable:$true] %s19
      %s21 = sshll.u32 [#allocation2], 4
      %s22 = int_to_ptr.vmem [resolvable:$true] %s21
      %24 = dma.hbm_to_vmem [thread:$0]  %s20, 32, %s22, [#allocation3]
    $region5: #{tpu_custom_call.1} parent=1 // pred_fallthru
      _
    // Predicated region
    $region6: #{tpu_custom_call.1} parent=1 // pred_check
      _
    $region7: #{tpu_custom_call.1} parent=1 // pred_check_branch
      %26 = sbr.rel (0) target = $region9
    $region8: #{tpu_custom_call.1} parent=1 // pred_region
      %28 = vsyncadd [#allocation6], 0
      %s29 = sshll.u32 %s1, 4
      %s30 = int_to_ptr.hbm [resolvable:$true] %s29
      %s31 = sshll.u32 [#allocation5], 4
      %s32 = int_to_ptr.vmem [resolvable:$true] %s31
      %37 = dma.hbm_to_vmem [thread:$0]  %s30, 4096, %s32, [#allocation6], 256, 256, 16
    $region9: #{tpu_custom_call.1} parent=1 // pred_fallthru
      _
    // Predicated region
    $region10: #{tpu_custom_call.1} parent=1 // pred_check
      _
    $region11: #{tpu_custom_call.1} parent=1 // pred_check_branch
      %39 = sbr.rel (0) target = $region13
    $region12: #{tpu_custom_call.1} parent=1 // pred_region
      %41 = vsyncadd [#allocation6], 0
      %s43 = sshll.u32 %s2, 4
      %s44 = int_to_ptr.hbm [resolvable:$true] %s43
      %s45 = sshll.u32 [#allocation7], 4
      %s46 = int_to_ptr.vmem [resolvable:$true] %s45
      %48 = dma.hbm_to_vmem [thread:$0]  %s44, 32, %s46, [#allocation6]
    $region13: #{tpu_custom_call.1} parent=1 // pred_fallthru
      _
    // Predicated region
    $region14: #{tpu_custom_call.1} parent=1 // pred_check
      _
    $region15: #{tpu_custom_call.1} parent=1 // pred_check_branch
      %50 = sbr.rel (0) target = $region17
    $region16: #{tpu_custom_call.1} parent=1 // pred_region
      %52 = dma.done [#allocation3], 32
    $region17: #{tpu_custom_call.1} parent=1 // pred_fallthru
      _
    // Predicated region
    $region18: #{tpu_custom_call.1} parent=1 // pred_check
      _
    $region19: #{tpu_custom_call.1} parent=1 // pred_check_branch
      %54 = sbr.rel (0) target = $region21
    $region20: #{tpu_custom_call.1} parent=1 // pred_region
      %56 = dma.done [#allocation6], 4096
    $region21: #{tpu_custom_call.1} parent=1 // pred_fallthru
      _
    // Predicated region
    $region22: #{tpu_custom_call.1} parent=1 // pred_check
      _
    $region23: #{tpu_custom_call.1} parent=1 // pred_check_branch
      %58 = sbr.rel (0) target = $region25
    $region24: #{tpu_custom_call.1} parent=1 // pred_region
      %60 = dma.done [#allocation6], 32
    $region25: #{tpu_custom_call.1} parent=1 // pred_fallthru
      _
    %v61 = vld [vmem:[#allocation2] sm:$0x3]
    %v62 = vxor.u32 %v61, 2147483648
    %v63 = vmul.f32 %v62, 1.442695
    %v64 = vpow.pop %v63
    %v65 = vadd.f32 %v64, 1.0
    %v66 = vrcp.pop %v65
    %v67 = vmul.f32 %v65, %v66
    %v68 = vsub.f32 1.0, %v67
    %v69 = vmul.f32 %v66, %v68
    %v70 = vadd.f32 %v66, %v69
    %vm71 = vweird.f32 %v65
    %vm72 = vweird.f32 %v66
    %vm73 = vmor %vm71, %vm72
    %v74 = vsel %vm73, %v66, %v70
    %v75 = vand.u32 2147483647, %v65
    %vm76 = vcmp.eq.f32.partialorder %v75, 8.507059e+37
    %v77 = vand.u32 %v65, 2147483648
    %v78 = vor.u32 1.1754944e-38, %v77
    %v79 = vsel %vm76, %v78, %v74
    %v80 = vmul.f32 1.0, %v79
    %v81 = vmul.f32 %v61, %v80
    %v82 = vld [vmem:[#allocation5] sm:$0xff]
    %v83 = vld [vmem:[#allocation5 + $0x8] sm:$0xff]
    %v84 = vld [vmem:[#allocation5 + $0x10] sm:$0xff]
    %v85 = vld [vmem:[#allocation5 + $0x18] sm:$0xff]
    %v86 = vld [vmem:[#allocation5 + $0x20] sm:$0xff]
    %v87 = vld [vmem:[#allocation5 + $0x28] sm:$0xff]
    %v88 = vld [vmem:[#allocation5 + $0x30] sm:$0xff]
    %v89 = vld [vmem:[#allocation5 + $0x38] sm:$0xff]
    %v90 = vld [vmem:[#allocation5 + $0x40] sm:$0xff]
    %v91 = vld [vmem:[#allocation5 + $0x48] sm:$0xff]
    %v92 = vld [vmem:[#allocation5 + $0x50] sm:$0xff]
    %v93 = vld [vmem:[#allocation5 + $0x58] sm:$0xff]
    %v94 = vld [vmem:[#allocation5 + $0x60] sm:$0xff]
    %v95 = vld [vmem:[#allocation5 + $0x68] sm:$0xff]
    %v96 = vld [vmem:[#allocation5 + $0x70] sm:$0xff]
    %v97 = vld [vmem:[#allocation5 + $0x78] sm:$0xff]
    %v98 = vld [vmem:[#allocation5 + $0x80] sm:$0xff]
    %v99 = vld [vmem:[#allocation5 + $0x88] sm:$0xff]
    %v100 = vld [vmem:[#allocation5 + $0x90] sm:$0xff]
    %v101 = vld [vmem:[#allocation5 + $0x98] sm:$0xff]
    %v102 = vld [vmem:[#allocation5 + $0xa0] sm:$0xff]
    %v103 = vld [vmem:[#allocation5 + $0xa8] sm:$0xff]
    %v104 = vld [vmem:[#allocation5 + $0xb0] sm:$0xff]
    %v105 = vld [vmem:[#allocation5 + $0xb8] sm:$0xff]
    %v106 = vld [vmem:[#allocation5 + $0xc0] sm:$0xff]
    %v107 = vld [vmem:[#allocation5 + $0xc8] sm:$0xff]
    %v108 = vld [vmem:[#allocation5 + $0xd0] sm:$0xff]
    %v109 = vld [vmem:[#allocation5 + $0xd8] sm:$0xff]
    %v110 = vld [vmem:[#allocation5 + $0xe0] sm:$0xff]
    %v111 = vld [vmem:[#allocation5 + $0xe8] sm:$0xff]
    %v112 = vld [vmem:[#allocation5 + $0xf0] sm:$0xff]
    %v113 = vld [vmem:[#allocation5 + $0xf8] sm:$0xff]
    %v114 = vld [vmem:[#allocation7] sm:$0x3]
    %v116 = vperm.slane %v114, 0
    %v117 = vperm.slane %v114, 1
    %120 = vmatpush.msra.mxu0 %v112
    %121 = vmatpush.msra.mxu0 %v110
    %122 = vmatpush.msra.mxu0 %v108
    %123 = vmatpush.msra.mxu0 %v106
    %124 = vmatpush.msra.mxu0 %v104
    %125 = vmatpush.msra.mxu0 %v102
    %126 = vmatpush.msra.mxu0 %v100
    %127 = vmatpush.msra.mxu0 %v98
    %128 = vmatpush.msra.mxu0 %v96
    %129 = vmatpush.msra.mxu0 %v94
    %130 = vmatpush.msra.mxu0 %v92
    %131 = vmatpush.msra.mxu0 %v90
    %132 = vmatpush.msra.mxu0 %v88
    %133 = vmatpush.msra.mxu0 %v86
    %134 = vmatpush.msra.mxu0 %v84
    %135 = vmatpush.msra.mxu0 %v82
    %136 = vmatmul.f32.gmra.mxu0 %v81
    %v137 = vpop.f32.mrf.mxu0
    %v138 = vadd.f32 %v116, %v137
    %139 = vdwg.mxu0
    %140 = vmatpush.msra.mxu0 %v113
    %141 = vmatpush.msra.mxu0 %v111
    %142 = vmatpush.msra.mxu0 %v109
    %143 = vmatpush.msra.mxu0 %v107
    %144 = vmatpush.msra.mxu0 %v105
    %145 = vmatpush.msra.mxu0 %v103
    %146 = vmatpush.msra.mxu0 %v101
    %147 = vmatpush.msra.mxu0 %v99
    %148 = vmatpush.msra.mxu0 %v97
    %149 = vmatpush.msra.mxu0 %v95
    %150 = vmatpush.msra.mxu0 %v93
    %151 = vmatpush.msra.mxu0 %v91
    %152 = vmatpush.msra.mxu0 %v89
    %153 = vmatpush.msra.mxu0 %v87
    %154 = vmatpush.msra.mxu0 %v85
    %155 = vmatpush.msra.mxu0 %v83
    %156 = vmatmul.f32.gmra.mxu0 %v81
    %v157 = vpop.f32.mrf.mxu0
    %v158 = vadd.f32 %v117, %v157
    %159 = vdwg.mxu0
    %160 = vst [vmem:[#allocation8] sm:$0x3] %v138
    %161 = vst [vmem:[#allocation9] sm:$0x3] %v158
    // Predicated region
    $region26: #{tpu_custom_call.1} parent=1 // pred_check
      _
    $region27: #{tpu_custom_call.1} parent=1 // pred_check_branch
      %163 = sbr.rel (0) target = $region29
    $region28: #{tpu_custom_call.1} parent=1 // pred_region
      %165 = vsyncadd [#allocation4], 0
      %s167 = sshll.u32 [#allocation8], 4
      %s168 = int_to_ptr.vmem [resolvable:$true] %s167
      %s169 = sshll.u32 %s3, 4
      %s170 = int_to_ptr.hbm [resolvable:$true] %s169
      %172 = dma.vmem_to_hbm [thread:$0]  %s168, 32, %s170, [#allocation4]
    $region29: #{tpu_custom_call.1} parent=1 // pred_fallthru
      _
    // Predicated region
    $region30: #{tpu_custom_call.1} parent=1 // pred_check
      _
    $region31: #{tpu_custom_call.1} parent=1 // pred_check_branch
      %174 = sbr.rel (0) target = $region33
    $region32: #{tpu_custom_call.1} parent=1 // pred_region
      %176 = vsyncadd [#allocation10], 0
      %s178 = sshll.u32 [#allocation9], 4
      %s179 = int_to_ptr.vmem [resolvable:$true] %s178
      %s180 = sshll.u32 %s4, 4
      %s181 = int_to_ptr.hbm [resolvable:$true] %s180
      %183 = dma.vmem_to_hbm [thread:$0]  %s179, 32, %s181, [#allocation10]
    $region33: #{tpu_custom_call.1} parent=1 // pred_fallthru
      _
    // Predicated region
    $region34: #{tpu_custom_call.1} parent=1 // pred_check
      _
    $region35: #{tpu_custom_call.1} parent=1 // pred_check_branch
      %185 = sbr.rel (0) target = $region37
    $region36: #{tpu_custom_call.1} parent=1 // pred_region
      %187 = dma.done [#allocation4], 32
    $region37: #{tpu_custom_call.1} parent=1 // pred_fallthru
      _
    // Predicated region
    $region38: #{tpu_custom_call.1} parent=1 // pred_check
      _
    $region39: #{tpu_custom_call.1} parent=1 // pred_check_branch
      %189 = sbr.rel (0) target = $region41
    $region40: #{tpu_custom_call.1} parent=1 // pred_region
      %191 = dma.done [#allocation10], 32
    $region41: #{tpu_custom_call.1} parent=1 // pred_fallthru
      _
    %192 = vsyncpa [#allocation3], 1
    %193 = vsyncpa [#allocation6], 1
    %194 = vsyncpa [#allocation4], 1
    %195 = vsyncpa [#allocation10], 1

</llo_original>
